<compile_context>
chip_gen: v6e
topology: v6e:2x2x1
jax: 0.10.0
libtpu: 0.0.40
codegen_flags: <defaults>
</compile_context>

<pallas_src>
import jax
import jax.numpy as jnp
from jax.experimental import pallas as pl
from jax.experimental.pallas import tpu as pltpu


def _fcn_head_kernel(x_ref, wb_ref, scale_ref, bias_ref, w2b_ref, b2_ref, o_ref):
    # x_ref    : (TM, 3*W*Cin)   rows = flattened (n, h); K axis = [ky=0 | ky=1 | ky=2] blocks
    # wb_ref   : (3*W*Cin, W*Cmid) banded 3x3-conv weights, all ky taps fused along K
    # scale_ref: (1, W*Cmid) f32  folded BN scale (applied post-matmul, keeps bf16 weights unscaled)
    # bias_ref : (1, W*Cmid) f32  folded BN bias
    # w2b_ref  : (W*Cmid, W*Cout) block-diagonal 1x1-conv weights
    # b2_ref   : (1, W*Cout) f32  1x1-conv bias
    # o_ref    : (TM, W*Cout)     lane-dense output rows
    # 3x3 conv: single large-K matmul (in-MXU K accumulation, f32 accumulator).
    acc = jnp.dot(x_ref[...], wb_ref[...], preferred_element_type=jnp.float32)
    # BatchNorm (inference, folded) in f32 + ReLU.
    h1 = jnp.maximum(acc * scale_ref[...] + bias_ref[...], 0.0)
    # TODO(synk): Dropout(0.1) is identity in eval mode; training-mode RNG masking not implemented.
    # 1x1 conv (block-diagonal matmul) + bias; result is already lane-dense (TM, W*Cout).
    y = jnp.dot(h1.astype(w2b_ref.dtype), w2b_ref[...], preferred_element_type=jnp.float32)
    o_ref[...] = (y + b2_ref[...]).astype(o_ref.dtype)


def prepare_fcn_head_params(w1, gamma, beta, rmean, rvar, w2, b2, *, W, eps=1e-5,
                            compute_dtype=jnp.bfloat16):
    """Hoisted weight preparation -- run ONCE per weight update, reuse across forward calls.

    Returns the banded conv1 weights (ky taps fused along K), block-diagonal conv2 weights,
    and the folded BatchNorm scale/bias + conv2 bias rows (f32).
    """
    Cmid, Cin = w1.shape[0], w1.shape[1]
    Cout = w2.shape[0]

    # Fold BN (inference) into a per-channel f32 scale/bias applied AFTER the first matmul.
    inv_std = 1.0 / jnp.sqrt(rvar + eps)
    scale = gamma * inv_std                                   # (Cmid,)
    bn_bias = beta - rmean * scale                            # (Cmid,)

    # Banded 3x3-conv weights: wb[ky][win*Cin + c, wout*Cmid + m] = w1[m, c, ky, win-wout+1]
    # (zeros off the band implement the W-edge padding). ky bands are stacked along K.
    w1t = jnp.transpose(w1, (2, 3, 1, 0))                     # (ky, kx, Cin, Cmid)
    bands = []
    for ky in range(3):
        band = jnp.zeros((W * Cin, W * Cmid), w1.dtype)
        for kx in range(3):
            band = band + jnp.kron(jnp.eye(W, k=1 - kx, dtype=w1.dtype), w1t[ky, kx])
        bands.append(band)
    wb = jnp.concatenate(bands, axis=0).astype(compute_dtype)  # (3*W*Cin, W*Cmid)

    # Block-diagonal 1x1-conv weights: (W*Cmid, W*Cout).
    # TODO(synk): once W*Cmid > 128 switch the 1x1 stage to a dense (M*W, Cmid)@(Cmid, Cout) matmul.
    w2m = w2.reshape(Cout, Cmid).T                            # (Cmid, Cout)
    w2b = jnp.kron(jnp.eye(W, dtype=w2m.dtype), w2m).astype(compute_dtype)

    scale_row = jnp.tile(scale, W).reshape(1, W * Cmid).astype(jnp.float32)
    bias_row = jnp.tile(bn_bias, W).reshape(1, W * Cmid).astype(jnp.float32)
    b2_row = jnp.tile(b2, W).reshape(1, W * Cout).astype(jnp.float32)
    return dict(wb=wb, scale_row=scale_row, bias_row=bias_row, w2b=w2b, b2_row=b2_row)


def _pick_row_block(m_rows):
    """Row-block (MXU M) size. Fill the 256-row MXU (v6e/v7x) when possible; otherwise split
    into 2 blocks so v7x's two TensorCores both get work. (Pass row_block=128 for v5e tuning.)"""
    if m_rows >= 512:
        return 256
    half = (m_rows // 2) // 8 * 8
    if half >= 8:
        return half
    return max(m_rows, 1)


def _invariant_spec(shape):
    """BlockSpec for a grid-invariant operand (whole array, constant index_map), single-buffered
    so resident weights are not needlessly doubled in VMEM."""
    index_map = lambda m: (0,) * len(shape)
    try:
        return pl.BlockSpec(shape, index_map, pipeline_mode=pl.Buffered(1))
    except TypeError:  # older BlockSpec signature without pipeline_mode
        return pl.BlockSpec(shape, index_map)


def fcn_head_forward(x_nchw, params, *, row_block=None, out_dtype=None):
    """Forward pass of _FCNHead. x_nchw: (N, Cin, H, W); returns (N, Cout, H, W)."""
    N, Cin, H, W = x_nchw.shape
    wb, scale_row, bias_row = params["wb"], params["scale_row"], params["bias_row"]
    w2b, b2_row = params["w2b"], params["b2_row"]
    compute_dtype = wb.dtype
    Cout = w2b.shape[1] // W
    assert wb.shape[0] == 3 * W * Cin, "prepared params do not match input shape"

    # VMEM budget guard: the banded weights grow quadratically in W; v7x has only 64 MiB VMEM.
    weight_bytes = int(wb.size) * wb.dtype.itemsize + int(w2b.size) * w2b.dtype.itemsize
    if weight_bytes > 40 * 1024 * 1024:
        # TODO(synk): fall back to row-band + Cin-reduction tiling (halo rows, 'arbitrary' K axis).
        raise NotImplementedError(
            f"banded FCNHead weights ({weight_bytes >> 20} MiB) exceed the ~40 MiB VMEM budget")

    # ---- lane-dense input: NHWC flattened to (N, H, W*Cin); pad H only (W handled by band) ----
    x_flat = jnp.transpose(x_nchw, (0, 2, 3, 1)).reshape(N, H, W * Cin).astype(compute_dtype)
    x_pad = jnp.pad(x_flat, ((0, 0), (1, 1), (0, 0)))          # (N, H+2, W*Cin)
    # Fuse the 3 ky taps along K (single in-kernel matmul, no sublane-offset slices).
    x_cat = jnp.concatenate([x_pad[:, ky:ky + H] for ky in range(3)], axis=-1)
    # Fold batch into the matmul M axis.
    x2d = x_cat.reshape(N * H, 3 * W * Cin)

    M = N * H
    if row_block is None:
        row_block = _pick_row_block(M)
    num_blocks = pl.cdiv(M, row_block)
    M_pad = num_blocks * row_block
    if M_pad != M:
        x2d = jnp.pad(x2d, ((0, M_pad - M), (0, 0)))

    out_dtype = x_nchw.dtype if out_dtype is None else out_dtype  # bf16 halves writeback if ok

    out2d = pl.pallas_call(
        _fcn_head_kernel,
        out_shape=jax.ShapeDtypeStruct((M_pad, W * Cout), out_dtype),
        grid=(num_blocks,),
        in_specs=[
            pl.BlockSpec((row_block, 3 * W * Cin), lambda m: (m, 0)),
            _invariant_spec(wb.shape),
            _invariant_spec(scale_row.shape),
            _invariant_spec(bias_row.shape),
            _invariant_spec(w2b.shape),
            _invariant_spec(b2_row.shape),
        ],
        out_specs=pl.BlockSpec((row_block, W * Cout), lambda m: (m, 0)),
        compiler_params=pltpu.CompilerParams(
            dimension_semantics=("parallel",),       # row blocks shard across v7x's 2 TCs
            vmem_limit_bytes=32 * 1024 * 1024,
        ),
    )(x2d, wb, scale_row, bias_row, w2b, b2_row)

    out = out2d[:M].reshape(N, H, W, Cout)                      # layout plumbing only
    return jnp.transpose(out, (0, 3, 1, 2))                     # back to NCHW


def _reference_forward(x_nchw, w1, gamma, beta, rmean, rvar, w2, b2, eps=1e-5):
    y = jax.lax.conv_general_dilated(
        x_nchw, w1, window_strides=(1, 1), padding=((1, 1), (1, 1)),
        dimension_numbers=("NCHW", "OIHW", "NCHW"))
    scale = gamma / jnp.sqrt(rvar + eps)
    bias = beta - rmean * scale
    y = y * scale[None, :, None, None] + bias[None, :, None, None]
    y = jnp.maximum(y, 0.0)
    y = jax.lax.conv_general_dilated(
        y, w2, window_strides=(1, 1), padding=((0, 0), (0, 0)),
        dimension_numbers=("NCHW", "OIHW", "NCHW"))
    return y + b2[None, :, None, None]


if __name__ == "__main__":
    key = jax.random.PRNGKey(0)
    N, Cin, H, W = 2, 16, 16, 16
    Cmid = Cin // 4  # inter_channels
    Cout = 8

    k = jax.random.split(key, 8)
    x = jax.random.normal(k[0], (N, Cin, H, W), jnp.float32)
    # Conv2d(in_channels, inter_channels, 3, 1, 1, bias=False)
    w1 = jax.random.normal(k[1], (Cmid, Cin, 3, 3), jnp.float32) * 0.1
    # BatchNorm2d(inter_channels) parameters / running stats (inference)
    gamma = 1.0 + 0.1 * jax.random.normal(k[2], (Cmid,), jnp.float32)
    beta = 0.1 * jax.random.normal(k[3], (Cmid,), jnp.float32)
    rmean = 0.1 * jax.random.normal(k[4], (Cmid,), jnp.float32)
    rvar = 1.0 + 0.1 * jnp.abs(jax.random.normal(k[5], (Cmid,), jnp.float32))
    # Conv2d(inter_channels, out_channels, 1, 1, 0) with bias
    w2 = jax.random.normal(k[6], (Cout, Cmid, 1, 1), jnp.float32) * 0.1
    b2 = 0.1 * jax.random.normal(k[7], (Cout,), jnp.float32)

    ref = _reference_forward(x, w1, gamma, beta, rmean, rvar, w2, b2)

    # Weight prep hoisted out of the per-call path (compute once per weight update).
    params_bf16 = prepare_fcn_head_params(w1, gamma, beta, rmean, rvar, w2, b2, W=W)
    out = jax.block_until_ready(fcn_head_forward(x, params_bf16))
    assert out.shape == (N, Cout, H, W)
    assert jnp.allclose(out, ref, atol=1e-1, rtol=1e-1), "bf16 path mismatch vs reference"

    # f32 operand path: tight algorithmic correctness check of the banded formulation.
    params_f32 = prepare_fcn_head_params(w1, gamma, beta, rmean, rvar, w2, b2, W=W,
                                         compute_dtype=jnp.float32)
    out_f32 = jax.block_until_ready(fcn_head_forward(x, params_f32))
    assert jnp.allclose(out_f32, ref, atol=1e-4, rtol=1e-4), "f32 path mismatch vs reference"

    print("KERNEL_OK")
</pallas_src>

<mosaic_0001>
module attributes {stable_mosaic.version = 11 : i64} {
  func.func @_fcn_head_kernel(%arg0: i32, %arg1: memref<16x768xbf16, #tpu.memory_space<vmem>>, %arg2: memref<768x64xbf16, #tpu.memory_space<vmem>>, %arg3: memref<1x64xf32, #tpu.memory_space<vmem>>, %arg4: memref<1x64xf32, #tpu.memory_space<vmem>>, %arg5: memref<64x128xbf16, #tpu.memory_space<vmem>>, %arg6: memref<1x128xf32, #tpu.memory_space<vmem>>, %arg7: memref<16x128xf32, #tpu.memory_space<vmem>>) attributes {dimension_semantics = [#tpu.dimension_semantics<parallel>], iteration_bounds = array<i64: 2>, scalar_prefetch = 0 : i64, scratch_operands = 0 : i64, tpu.core_type = #tpu.core_type<tc>, window_params = [{transform_indices = @transform_0, window_bounds = array<i64: 16, 768>}, {pipeline_mode = #tpu.pipeline_mode<synchronous>, transform_indices = @transform_1, window_bounds = array<i64: 768, 64>}, {pipeline_mode = #tpu.pipeline_mode<synchronous>, transform_indices = @transform_2, window_bounds = array<i64: 1, 64>}, {pipeline_mode = #tpu.pipeline_mode<synchronous>, transform_indices = @transform_3, window_bounds = array<i64: 1, 64>}, {pipeline_mode = #tpu.pipeline_mode<synchronous>, transform_indices = @transform_4, window_bounds = array<i64: 64, 128>}, {pipeline_mode = #tpu.pipeline_mode<synchronous>, transform_indices = @transform_5, window_bounds = array<i64: 1, 128>}, {transform_indices = @transform_6, window_bounds = array<i64: 16, 128>}]} {
    %c0 = arith.constant 0 : index
    %c0_0 = arith.constant 0 : index
    %0 = vector.load %arg1[%c0, %c0_0] : memref<16x768xbf16, #tpu.memory_space<vmem>>, vector<16x768xbf16>
    %c0_1 = arith.constant 0 : index
    %c0_2 = arith.constant 0 : index
    %1 = vector.load %arg2[%c0_1, %c0_2] : memref<768x64xbf16, #tpu.memory_space<vmem>>, vector<768x64xbf16>
    %cst = arith.constant dense<0.000000e+00> : vector<16x64xf32>
    %2 = tpu.matmul %0, %1, %cst {dimension_numbers = #tpu.dot_dimension_numbers<[1], [0], [0], [1], [0, 0, 1, 1], [], []>} : vector<16x768xbf16>, vector<768x64xbf16>, vector<16x64xf32> -> vector<16x64xf32>
    %c0_3 = arith.constant 0 : index
    %c0_4 = arith.constant 0 : index
    %3 = vector.load %arg3[%c0_3, %c0_4] : memref<1x64xf32, #tpu.memory_space<vmem>>, vector<1x64xf32>
    %4 = vector.broadcast %3 : vector<1x64xf32> to vector<16x64xf32>
    %5 = arith.mulf %2, %4 : vector<16x64xf32>
    %c0_5 = arith.constant 0 : index
    %c0_6 = arith.constant 0 : index
    %6 = vector.load %arg4[%c0_5, %c0_6] : memref<1x64xf32, #tpu.memory_space<vmem>>, vector<1x64xf32>
    %7 = vector.broadcast %6 : vector<1x64xf32> to vector<16x64xf32>
    %8 = arith.addf %5, %7 : vector<16x64xf32>
    %cst_7 = arith.constant 0.000000e+00 : f32
    %9 = vector.broadcast %cst_7 : f32 to vector<16x64xf32>
    %10 = arith.maximumf %8, %9 : vector<16x64xf32>
    %11 = arith.truncf %10 : vector<16x64xf32> to vector<16x64xbf16>
    %c0_8 = arith.constant 0 : index
    %c0_9 = arith.constant 0 : index
    %12 = vector.load %arg5[%c0_8, %c0_9] : memref<64x128xbf16, #tpu.memory_space<vmem>>, vector<64x128xbf16>
    %cst_10 = arith.constant dense<0.000000e+00> : vector<16x128xf32>
    %13 = tpu.matmul %11, %12, %cst_10 {dimension_numbers = #tpu.dot_dimension_numbers<[1], [0], [0], [1], [0, 0, 1, 1], [], []>} : vector<16x64xbf16>, vector<64x128xbf16>, vector<16x128xf32> -> vector<16x128xf32>
    %c0_11 = arith.constant 0 : index
    %c0_12 = arith.constant 0 : index
    %14 = vector.load %arg6[%c0_11, %c0_12] : memref<1x128xf32, #tpu.memory_space<vmem>>, vector<1x128xf32>
    %15 = vector.broadcast %14 : vector<1x128xf32> to vector<16x128xf32>
    %16 = arith.addf %13, %15 : vector<16x128xf32>
    %c0_13 = arith.constant 0 : index
    %c0_14 = arith.constant 0 : index
    %17 = vector.load %arg7[%c0_13, %c0_14] : memref<16x128xf32, #tpu.memory_space<vmem>>, vector<16x128xf32>
    tpu.vector_store %arg7[%c0_13, %c0_14], %16 {strides = array<i32>} : memref<16x128xf32, #tpu.memory_space<vmem>>, vector<16x128xf32>,
    return
  }
  func.func @transform_0(%arg0: i32) -> (i32, i32) {
    %c0_i32 = arith.constant 0 : i32
    %c0_i32_0 = arith.constant 0 : i32
    return %arg0, %c0_i32 : i32, i32
  }
  func.func @transform_1(%arg0: i32) -> (i32, i32) {
    %c0_i32 = arith.constant 0 : i32
    %c0_i32_0 = arith.constant 0 : i32
    %c0_i32_1 = arith.constant 0 : i32
    return %c0_i32, %c0_i32_0 : i32, i32
  }
  func.func @transform_2(%arg0: i32) -> (i32, i32) {
    %c0_i32 = arith.constant 0 : i32
    %c0_i32_0 = arith.constant 0 : i32
    %c0_i32_1 = arith.constant 0 : i32
    return %c0_i32, %c0_i32_0 : i32, i32
  }
  func.func @transform_3(%arg0: i32) -> (i32, i32) {
    %c0_i32 = arith.constant 0 : i32
    %c0_i32_0 = arith.constant 0 : i32
    %c0_i32_1 = arith.constant 0 : i32
    return %c0_i32, %c0_i32_0 : i32, i32
  }
  func.func @transform_4(%arg0: i32) -> (i32, i32) {
    %c0_i32 = arith.constant 0 : i32
    %c0_i32_0 = arith.constant 0 : i32
    %c0_i32_1 = arith.constant 0 : i32
    return %c0_i32, %c0_i32_0 : i32, i32
  }
  func.func @transform_5(%arg0: i32) -> (i32, i32) {
    %c0_i32 = arith.constant 0 : i32
    %c0_i32_0 = arith.constant 0 : i32
    %c0_i32_1 = arith.constant 0 : i32
    return %c0_i32, %c0_i32_0 : i32, i32
  }
  func.func @transform_6(%arg0: i32) -> (i32, i32) {
    %c0_i32 = arith.constant 0 : i32
    %c0_i32_0 = arith.constant 0 : i32
    return %arg0, %c0_i32 : i32, i32
  }
}

</mosaic_0001>

<llo_original>
// kernel: tpu_custom_call.1
$region0: #{tpu_custom_call.1}
  #allocation0 [shape = 'u32[]', space=smem, size = 0x4, offset = 0x4, fixed_abs, tag = 'smem constant byte address 0x4 - core index']
  #allocation1 [shape = 'u32[144,128]{1,0:T(1,128)}', space=vmem, size = 0x12000, scoped, tag = 'internal scratch']
  %s0 = inlined_call_operand.vmem [shape: bf16[32,768], index: 0, kind: input, shape index: {}]
  %s1 = inlined_call_operand.vmem [shape: bf16[768,64], index: 1, kind: input, shape index: {}]
  %s2 = inlined_call_operand.vmem [shape: f32[1,64], index: 2, kind: input, shape index: {}]
  %s3 = inlined_call_operand.vmem [shape: f32[1,64], index: 3, kind: input, shape index: {}]
  %s4 = inlined_call_operand.vmem [shape: bf16[64,128], index: 4, kind: input, shape index: {}]
  %s5 = inlined_call_operand.vmem [shape: f32[1,128], index: 5, kind: input, shape index: {}]
  %s6 = inlined_call_operand.hbm [shape: f32[32,128], index: 6, kind: output, shape index: {}]
  %s7 = sld [smem:[#allocation0]]
  $region57: #{tpu_custom_call.1} parent=0
    _
  %s9 = ssub.s32 1, %s7
  %s10 = scalar_select 0, %s9, %s7
  $region1: #{tpu_custom_call.1} parent=0
    #allocation2 [shape = 'u8[16384]{0}', space=vmem, size = 0x4000, scoped, tag = 'output window, operand 0']
    #allocation3 [shape = 's32[2]{0}', space=sflag, size = 0x8, scoped, tag = 'scoped memory for tpu_custom_call.1']
    %11 = vsyncpa [#allocation3], 0
    %s12 = scalar_lea.sflag [#allocation3], 1
    %13 = vsyncpa %s12, 0
    loop: start=0, step=1, limit=4
    $region2: #{tpu_custom_call.1} parent=1 // loop_pre_header
      _
    $region3: #{tpu_custom_call.1} parent=1 // loop_header
      %s15 = sphi 0, %s19
      %p16 = scmp.ge.s32.totalorder %s15, 4
      %s25 = sphi 0, %s27
      %s28 = sphi 0, %s25
      %s29 = sphi 0, %s28
      %s45 = sphi 0, %s29
      %s49 = sphi 0, %s49
      %s51 = sphi 0, %s49
      %s52 = sphi 0, %s51
      %s66 = sphi 0, %s52
      %s70 = sphi 0, %s70
      %s72 = sphi 0, %s70
      %s73 = sphi 0, %s72
      %s87 = sphi 0, %s73
      %s91 = sphi 0, %s91
      %s93 = sphi 0, %s91
      %s94 = sphi 0, %s93
      %s108 = sphi 0, %s94
      %s112 = sphi 0, %s112
      %s114 = sphi 0, %s112
      %s115 = sphi 0, %s114
      %s129 = sphi 0, %s115
      %s133 = sphi 0, %s133
      %s135 = sphi 0, %s133
      %s136 = sphi 0, %s135
      %s150 = sphi 0, %s136
      %s156 = sphi 0, %s158
      %s159 = sphi 0, %s156
      %s160 = sphi 0, %s159
      %s176 = sphi 0, %s160
    $region4: #{tpu_custom_call.1} parent=1 // loop_header_branch
      %18 = sbr.rel (%p16) target = $region8
    $region5: #{tpu_custom_call.1} parent=1 // loop_body
      %s20 = ssub.s32 %s15, 1
      %s21 = ssub.s32 %s15, 2
      %s22 = sadd.s32 %s15, 1
      %s23 = ssub.s32 %s15, %s22
      %p24 = scmp.eq.s32.totalorder %s23, 0
      %s26 = sadd.s32 %s25, 1
      %s27 = scalar_select %p24, %s25, %s26
      %p30 = pneg %p24
      %p31 = scmp.eq.s32.totalorder %s15, 1
      %p32 = por %p30, %p31
      %p33 = scmp.ne.s32.totalorder %s25, %s28
      %p34 = scmp.eq.s32.totalorder %s15, 0
      %p35 = por %p33, %p34
      %p36 = scmp.ne.s32.totalorder %s25, %s28
      %p37 = scmp.eq.s32.totalorder %s20, 1
      %p38 = por %p36, %p37
      %p39 = scmp.ne.s32.totalorder %s28, %s29
      %p40 = scmp.eq.s32.totalorder %s20, 0
      %p41 = por %p39, %p40
      %p42 = scmp.ne.s32.totalorder %s28, %s29
      %p43 = scmp.eq.s32.totalorder %s21, 1
      %p44 = por %p42, %p43
      %p46 = scmp.ne.s32.totalorder %s29, %s45
      %p47 = scmp.eq.s32.totalorder %s21, 0
      %p48 = por %p46, %p47
      %s50 = sadd.s32 %s49, 1
      %p53 = scmp.eq.s32.totalorder %s15, 1
      %p54 = scmp.ne.s32.totalorder %s49, %s51
      %p55 = scmp.eq.s32.totalorder %s15, 0
      %p56 = por %p54, %p55
      %p57 = scmp.ne.s32.totalorder %s49, %s51
      %p58 = scmp.eq.s32.totalorder %s20, 1
      %p59 = por %p57, %p58
      %p60 = scmp.ne.s32.totalorder %s51, %s52
      %p61 = scmp.eq.s32.totalorder %s20, 0
      %p62 = por %p60, %p61
      %p63 = scmp.ne.s32.totalorder %s51, %s52
      %p64 = scmp.eq.s32.totalorder %s21, 1
      %p65 = por %p63, %p64
      %p67 = scmp.ne.s32.totalorder %s52, %s66
      %p68 = scmp.eq.s32.totalorder %s21, 0
      %p69 = por %p67, %p68
      %s71 = sadd.s32 %s70, 1
      %p74 = scmp.eq.s32.totalorder %s15, 1
      %p75 = scmp.ne.s32.totalorder %s70, %s72
      %p76 = scmp.eq.s32.totalorder %s15, 0
      %p77 = por %p75, %p76
      %p78 = scmp.ne.s32.totalorder %s70, %s72
      %p79 = scmp.eq.s32.totalorder %s20, 1
      %p80 = por %p78, %p79
      %p81 = scmp.ne.s32.totalorder %s72, %s73
      %p82 = scmp.eq.s32.totalorder %s20, 0
      %p83 = por %p81, %p82
      %p84 = scmp.ne.s32.totalorder %s72, %s73
      %p85 = scmp.eq.s32.totalorder %s21, 1
      %p86 = por %p84, %p85
      %p88 = scmp.ne.s32.totalorder %s73, %s87
      %p89 = scmp.eq.s32.totalorder %s21, 0
      %p90 = por %p88, %p89
      %s92 = sadd.s32 %s91, 1
      %p95 = scmp.eq.s32.totalorder %s15, 1
      %p96 = scmp.ne.s32.totalorder %s91, %s93
      %p97 = scmp.eq.s32.totalorder %s15, 0
      %p98 = por %p96, %p97
      %p99 = scmp.ne.s32.totalorder %s91, %s93
      %p100 = scmp.eq.s32.totalorder %s20, 1
      %p101 = por %p99, %p100
      %p102 = scmp.ne.s32.totalorder %s93, %s94
      %p103 = scmp.eq.s32.totalorder %s20, 0
      %p104 = por %p102, %p103
      %p105 = scmp.ne.s32.totalorder %s93, %s94
      %p106 = scmp.eq.s32.totalorder %s21, 1
      %p107 = por %p105, %p106
      %p109 = scmp.ne.s32.totalorder %s94, %s108
      %p110 = scmp.eq.s32.totalorder %s21, 0
      %p111 = por %p109, %p110
      %s113 = sadd.s32 %s112, 1
      %p116 = scmp.eq.s32.totalorder %s15, 1
      %p117 = scmp.ne.s32.totalorder %s112, %s114
      %p118 = scmp.eq.s32.totalorder %s15, 0
      %p119 = por %p117, %p118
      %p120 = scmp.ne.s32.totalorder %s112, %s114
      %p121 = scmp.eq.s32.totalorder %s20, 1
      %p122 = por %p120, %p121
      %p123 = scmp.ne.s32.totalorder %s114, %s115
      %p124 = scmp.eq.s32.totalorder %s20, 0
      %p125 = por %p123, %p124
      %p126 = scmp.ne.s32.totalorder %s114, %s115
      %p127 = scmp.eq.s32.totalorder %s21, 1
      %p128 = por %p126, %p127
      %p130 = scmp.ne.s32.totalorder %s115, %s129
      %p131 = scmp.eq.s32.totalorder %s21, 0
      %p132 = por %p130, %p131
      %s134 = sadd.s32 %s133, 1
      %p137 = scmp.eq.s32.totalorder %s15, 1
      %p138 = scmp.ne.s32.totalorder %s133, %s135
      %p139 = scmp.eq.s32.totalorder %s15, 0
      %p140 = por %p138, %p139
      %p141 = scmp.ne.s32.totalorder %s133, %s135
      %p142 = scmp.eq.s32.totalorder %s20, 1
      %p143 = por %p141, %p142
      %p144 = scmp.ne.s32.totalorder %s135, %s136
      %p145 = scmp.eq.s32.totalorder %s20, 0
      %p146 = por %p144, %p145
      %p147 = scmp.ne.s32.totalorder %s135, %s136
      %p148 = scmp.eq.s32.totalorder %s21, 1
      %p149 = por %p147, %p148
      %p151 = scmp.ne.s32.totalorder %s136, %s150
      %p152 = scmp.eq.s32.totalorder %s21, 0
      %p153 = por %p151, %p152
      %s154 = ssub.s32 %s15, %s22
      %p155 = scmp.eq.s32.totalorder %s154, 0
      %s157 = sadd.s32 %s156, 1
      %s158 = scalar_select %p155, %s156, %s157
      %p161 = pneg %p155
      %p162 = scmp.eq.s32.totalorder %s15, 1
      %p163 = por %p161, %p162
      %p164 = scmp.ne.s32.totalorder %s156, %s159
      %p165 = scmp.eq.s32.totalorder %s15, 0
      %p166 = por %p164, %p165
      %p167 = scmp.ne.s32.totalorder %s156, %s159
      %p168 = scmp.eq.s32.totalorder %s20, 1
      %p169 = por %p167, %p168
      %p170 = scmp.ne.s32.totalorder %s159, %s160
      %p171 = scmp.eq.s32.totalorder %s20, 0
      %p172 = por %p170, %p171
      %p173 = scmp.ne.s32.totalorder %s159, %s160
      %p174 = scmp.eq.s32.totalorder %s21, 1
      %p175 = por %p173, %p174
      %p177 = scmp.ne.s32.totalorder %s160, %s176
      %p178 = scmp.eq.s32.totalorder %s21, 0
      %p179 = por %p177, %p178
      %p180 = scmp.le.s32.totalorder 1, %s15
      %p181 = scmp.lt.s32.totalorder %s15, 3
      %p182 = pnand %p180, %p181
      %p183 = pneg %p182
      // Predicated region
      $region9: #{tpu_custom_call.1} parent=5 // pred_check
        _
      $region10: #{tpu_custom_call.1} parent=5 // pred_check_branch
        %185 = sbr.rel (%p182) target = $region12
      $region11: #{tpu_custom_call.1} parent=5 // pred_region
        %s186 = ssub.s32 %s15, 1
        // Predicated region
        $region13: #{tpu_custom_call.1} parent=11 // pred_check
          %p187 = pneg %p62
        $region14: #{tpu_custom_call.1} parent=11 // pred_check_branch
          %189 = sbr.rel (%p187) target = $region16
        $region15: #{tpu_custom_call.1} parent=11 // pred_region
          _
        $region16: #{tpu_custom_call.1} parent=11 // pred_fallthru
          _
        // Predicated region
        $region17: #{tpu_custom_call.1} parent=11 // pred_check
          %p190 = pneg %p83
        $region18: #{tpu_custom_call.1} parent=11 // pred_check_branch
          %192 = sbr.rel (%p190) target = $region20
        $region19: #{tpu_custom_call.1} parent=11 // pred_region
          _
        $region20: #{tpu_custom_call.1} parent=11 // pred_fallthru
          _
        // Predicated region
        $region21: #{tpu_custom_call.1} parent=11 // pred_check
          %p193 = pneg %p104
        $region22: #{tpu_custom_call.1} parent=11 // pred_check_branch
          %195 = sbr.rel (%p193) target = $region24
        $region23: #{tpu_custom_call.1} parent=11 // pred_region
          _
        $region24: #{tpu_custom_call.1} parent=11 // pred_fallthru
          _
        // Predicated region
        $region25: #{tpu_custom_call.1} parent=11 // pred_check
          %p196 = pneg %p125
        $region26: #{tpu_custom_call.1} parent=11 // pred_check_branch
          %198 = sbr.rel (%p196) target = $region28
        $region27: #{tpu_custom_call.1} parent=11 // pred_region
          _
        $region28: #{tpu_custom_call.1} parent=11 // pred_fallthru
          _
        // Predicated region
        $region29: #{tpu_custom_call.1} parent=11 // pred_check
          %p199 = pneg %p146
        $region30: #{tpu_custom_call.1} parent=11 // pred_check_branch
          %201 = sbr.rel (%p199) target = $region32
        $region31: #{tpu_custom_call.1} parent=11 // pred_region
          _
        $region32: #{tpu_custom_call.1} parent=11 // pred_fallthru
          _
      $region12: #{tpu_custom_call.1} parent=5 // pred_fallthru
        _
      %p202 = scmp.lt.s32.totalorder %s15, 2
      // Predicated region
      $region33: #{tpu_custom_call.1} parent=5 // pred_check
        %p203 = pneg %p202
      $region34: #{tpu_custom_call.1} parent=5 // pred_check_branch
        %205 = sbr.rel (%p203) target = $region36
      $region35: #{tpu_custom_call.1} parent=5 // pred_region
        // Predicated region
        $region37: #{tpu_custom_call.1} parent=35 // pred_check
          %p206 = pneg %p35
        $region38: #{tpu_custom_call.1} parent=35 // pred_check_branch
          %208 = sbr.rel (%p206) target = $region40
        $region39: #{tpu_custom_call.1} parent=35 // pred_region
          %s209 = smul.u32 2, %s15
          %p210 = scmp.lt.s32.totalorder %s209, 3
          %s211 = scalar_select %p210, %s209, 3
          %s212 = smul.addr %s211, 6
          %s213 = smul.addr %s212, 4
          %s214 = scalar_lea.vmem %s0, %s213
          %s215 = smul.u32 2, %s15
        $region40: #{tpu_custom_call.1} parent=35 // pred_fallthru
          _
      $region36: #{tpu_custom_call.1} parent=5 // pred_fallthru
        _
      %p216 = scmp.le.s32.totalorder 1, %s15
      %p217 = scmp.lt.s32.totalorder %s15, 3
      %p218 = pnand %p216, %p217
      %p219 = pneg %p218
      // Predicated region
      $region41: #{tpu_custom_call.1} parent=5 // pred_check
        _
      $region42: #{tpu_custom_call.1} parent=5 // pred_check_branch
        %221 = sbr.rel (%p218) target = $region44
      $region43: #{tpu_custom_call.1} parent=5 // pred_region
        %s222 = ssub.s32 %s15, 1
        %s223 = smul.u32 2, %s20
        %p224 = scmp.lt.s32.totalorder %s223, 3
        %s225 = scalar_select %p224, %s223, 3
        %s226 = smul.addr %s225, 6
        %s227 = smul.addr %s226, 4
        %s228 = scalar_lea.vmem %s0, %s227
        %p229 = pneg %p41
        %p230 = pneg %p38
        %p231 = pneg %p62
        %p232 = pneg %p59
        %p233 = pneg %p83
        %p234 = pneg %p80
        %p235 = pneg %p104
        %p236 = pneg %p101
        %p237 = pneg %p125
        %p238 = pneg %p122
        %p239 = pneg %p146
        %p240 = pneg %p143
        %p241 = pneg %p172
        %p242 = pneg %p169
        %s243 = sand.u32 %s159, 1
        %s244 = scalar_lea.sflag [#allocation3], %s243
        %s245 = sand.u32 %s159, 1
        %s246 = smul.addr %s245, 16
        %s247 = scalar_lea.vmem [#allocation2], %s246
        %s248 = smul.u32 2, %s20
        %p249 = scmp.lt.s32.totalorder %s248, 3
        %s250 = scalar_select %p249, %s248, 3
        %s251 = smul.addr %s250, 6
        %s252 = smul.addr %s251, 4
        %s253 = scalar_lea.vmem %s0, %s252
        %s254 = smul.u32 2, %s20
        %s255 = smul.u32 2, %s20
        %v257 = vld [vmem:[%s253] sm:$0xff]
        %v258 = vld [vmem:[%s253 + $0x8] sm:$0xff]
        %v259 = vld [vmem:[%s253 + $0x10] sm:$0xff]
        %v260 = vld [vmem:[%s253 + $0x18] sm:$0xff]
        %v261 = vld [vmem:[%s253 + $0x20] sm:$0xff]
        %v262 = vld [vmem:[%s253 + $0x28] sm:$0xff]
        %v263 = vld [vmem:[%s1] sm:$0xf]
        %v264 = vld [vmem:[%s1 + $0x4] sm:$0xf]
        %v265 = vld [vmem:[%s1 + $0x8] sm:$0xf]
        %v266 = vld [vmem:[%s1 + $0xc] sm:$0xf]
        %v267 = vld [vmem:[%s1 + $0x10] sm:$0xf]
        %v268 = vld [vmem:[%s1 + $0x14] sm:$0xf]
        %v269 = vld [vmem:[%s1 + $0x18] sm:$0xf]
        %v270 = vld [vmem:[%s1 + $0x1c] sm:$0xf]
        %v271 = vld [vmem:[%s1 + $0x20] sm:$0xf]
        %v272 = vld [vmem:[%s1 + $0x24] sm:$0xf]
        %v273 = vld [vmem:[%s1 + $0x28] sm:$0xf]
        %v274 = vld [vmem:[%s1 + $0x2c] sm:$0xf]
        %v275 = vld [vmem:[%s1 + $0x30] sm:$0xf]
        %v276 = vld [vmem:[%s1 + $0x34] sm:$0xf]
        %v277 = vld [vmem:[%s1 + $0x38] sm:$0xf]
        %v278 = vld [vmem:[%s1 + $0x3c] sm:$0xf]
        %v279 = vld [vmem:[%s1 + $0x40] sm:$0xf]
        %v280 = vld [vmem:[%s1 + $0x44] sm:$0xf]
        %v281 = vld [vmem:[%s1 + $0x48] sm:$0xf]
        %v282 = vld [vmem:[%s1 + $0x4c] sm:$0xf]
        %v283 = vld [vmem:[%s1 + $0x50] sm:$0xf]
        %v284 = vld [vmem:[%s1 + $0x54] sm:$0xf]
        %v285 = vld [vmem:[%s1 + $0x58] sm:$0xf]
        %v286 = vld [vmem:[%s1 + $0x5c] sm:$0xf]
        %v287 = vld [vmem:[%s1 + $0x60] sm:$0xf]
        %v288 = vld [vmem:[%s1 + $0x64] sm:$0xf]
        %v289 = vld [vmem:[%s1 + $0x68] sm:$0xf]
        %v290 = vld [vmem:[%s1 + $0x6c] sm:$0xf]
        %v291 = vld [vmem:[%s1 + $0x70] sm:$0xf]
        %v292 = vld [vmem:[%s1 + $0x74] sm:$0xf]
        %v293 = vld [vmem:[%s1 + $0x78] sm:$0xf]
        %v294 = vld [vmem:[%s1 + $0x7c] sm:$0xf]
        %v295 = vld [vmem:[%s1 + $0x80] sm:$0xf]
        %v296 = vld [vmem:[%s1 + $0x84] sm:$0xf]
        %v297 = vld [vmem:[%s1 + $0x88] sm:$0xf]
        %v298 = vld [vmem:[%s1 + $0x8c] sm:$0xf]
        %v299 = vld [vmem:[%s1 + $0x90] sm:$0xf]
        %v300 = vld [vmem:[%s1 + $0x94] sm:$0xf]
        %v301 = vld [vmem:[%s1 + $0x98] sm:$0xf]
        %v302 = vld [vmem:[%s1 + $0x9c] sm:$0xf]
        %v303 = vld [vmem:[%s1 + $0xa0] sm:$0xf]
        %v304 = vld [vmem:[%s1 + $0xa4] sm:$0xf]
        %v305 = vld [vmem:[%s1 + $0xa8] sm:$0xf]
        %v306 = vld [vmem:[%s1 + $0xac] sm:$0xf]
        %v307 = vld [vmem:[%s1 + $0xb0] sm:$0xf]
        %v308 = vld [vmem:[%s1 + $0xb4] sm:$0xf]
        %v309 = vld [vmem:[%s1 + $0xb8] sm:$0xf]
        %v310 = vld [vmem:[%s1 + $0xbc] sm:$0xf]
        %v311 = vld [vmem:[%s1 + $0xc0] sm:$0xf]
        %v312 = vld [vmem:[%s1 + $0xc4] sm:$0xf]
        %v313 = vld [vmem:[%s1 + $0xc8] sm:$0xf]
        %v314 = vld [vmem:[%s1 + $0xcc] sm:$0xf]
        %v315 = vld [vmem:[%s1 + $0xd0] sm:$0xf]
        %v316 = vld [vmem:[%s1 + $0xd4] sm:$0xf]
        %v317 = vld [vmem:[%s1 + $0xd8] sm:$0xf]
        %v318 = vld [vmem:[%s1 + $0xdc] sm:$0xf]
        %v319 = vld [vmem:[%s1 + $0xe0] sm:$0xf]
        %v320 = vld [vmem:[%s1 + $0xe4] sm:$0xf]
        %v321 = vld [vmem:[%s1 + $0xe8] sm:$0xf]
        %v322 = vld [vmem:[%s1 + $0xec] sm:$0xf]
        %v323 = vld [vmem:[%s1 + $0xf0] sm:$0xf]
        %v324 = vld [vmem:[%s1 + $0xf4] sm:$0xf]
        %v325 = vld [vmem:[%s1 + $0xf8] sm:$0xf]
        %v326 = vld [vmem:[%s1 + $0xfc] sm:$0xf]
        %v327 = vld [vmem:[%s1 + $0x100] sm:$0xf]
        %v328 = vld [vmem:[%s1 + $0x104] sm:$0xf]
        %v329 = vld [vmem:[%s1 + $0x108] sm:$0xf]
        %v330 = vld [vmem:[%s1 + $0x10c] sm:$0xf]
        %v331 = vld [vmem:[%s1 + $0x110] sm:$0xf]
        %v332 = vld [vmem:[%s1 + $0x114] sm:$0xf]
        %v333 = vld [vmem:[%s1 + $0x118] sm:$0xf]
        %v334 = vld [vmem:[%s1 + $0x11c] sm:$0xf]
        %v335 = vld [vmem:[%s1 + $0x120] sm:$0xf]
        %v336 = vld [vmem:[%s1 + $0x124] sm:$0xf]
        %v337 = vld [vmem:[%s1 + $0x128] sm:$0xf]
        %v338 = vld [vmem:[%s1 + $0x12c] sm:$0xf]
        %v339 = vld [vmem:[%s1 + $0x130] sm:$0xf]
        %v340 = vld [vmem:[%s1 + $0x134] sm:$0xf]
        %v341 = vld [vmem:[%s1 + $0x138] sm:$0xf]
        %v342 = vld [vmem:[%s1 + $0x13c] sm:$0xf]
        %v343 = vld [vmem:[%s1 + $0x140] sm:$0xf]
        %v344 = vld [vmem:[%s1 + $0x144] sm:$0xf]
        %v345 = vld [vmem:[%s1 + $0x148] sm:$0xf]
        %v346 = vld [vmem:[%s1 + $0x14c] sm:$0xf]
        %v347 = vld [vmem:[%s1 + $0x150] sm:$0xf]
        %v348 = vld [vmem:[%s1 + $0x154] sm:$0xf]
        %v349 = vld [vmem:[%s1 + $0x158] sm:$0xf]
        %v350 = vld [vmem:[%s1 + $0x15c] sm:$0xf]
        %v351 = vld [vmem:[%s1 + $0x160] sm:$0xf]
        %v352 = vld [vmem:[%s1 + $0x164] sm:$0xf]
        %v353 = vld [vmem:[%s1 + $0x168] sm:$0xf]
        %v354 = vld [vmem:[%s1 + $0x16c] sm:$0xf]
        %v355 = vld [vmem:[%s1 + $0x170] sm:$0xf]
        %v356 = vld [vmem:[%s1 + $0x174] sm:$0xf]
        %v357 = vld [vmem:[%s1 + $0x178] sm:$0xf]
        %v358 = vld [vmem:[%s1 + $0x17c] sm:$0xf]
        %v365 = vunpack.c.l.b16 %v257
        %v366 = vunpack.c.h.b16 %v257
        %v367 = vunpack.c.l.b16 %v258
        %v368 = vunpack.c.h.b16 %v258
        %v369 = vunpack.c.l.b16 %v259
        %v370 = vunpack.c.h.b16 %v259
        %v371 = vunpack.c.l.b16 %v260
        %v372 = vunpack.c.h.b16 %v260
        %v373 = vunpack.c.l.b16 %v261
        %v374 = vunpack.c.h.b16 %v261
        %v375 = vunpack.c.l.b16 %v262
        %v376 = vunpack.c.h.b16 %v262
        %v377 = vpack.c.b16 %v371, %v365
        %v378 = vpack.c.b16 %v372, %v366
        %v379 = vpack.c.b16 %v373, %v367
        %v380 = vpack.c.b16 %v374, %v368
        %v381 = vpack.c.b16 %v375, %v369
        %v382 = vpack.c.b16 %v376, %v370
        %v485 = vunpack.c.l.b16 %v263
        %v486 = vunpack.c.l.b16 %v264
        %v487 = vunpack.c.l.b16 %v265
        %v488 = vunpack.c.l.b16 %v266
        %v489 = vunpack.c.l.b16 %v267
        %v490 = vunpack.c.l.b16 %v268
        %v491 = vunpack.c.l.b16 %v269
        %v492 = vunpack.c.l.b16 %v270
        %v493 = vunpack.c.l.b16 %v271
        %v494 = vunpack.c.l.b16 %v272
        %v495 = vunpack.c.l.b16 %v273
        %v496 = vunpack.c.l.b16 %v274
        %v497 = vunpack.c.l.b16 %v275
        %v498 = vunpack.c.l.b16 %v276
        %v499 = vunpack.c.l.b16 %v277
        %v500 = vunpack.c.l.b16 %v278
        %v501 = vunpack.c.l.b16 %v279
        %v502 = vunpack.c.l.b16 %v280
        %v503 = vunpack.c.l.b16 %v281
        %v504 = vunpack.c.l.b16 %v282
        %v505 = vunpack.c.l.b16 %v283
        %v506 = vunpack.c.l.b16 %v284
        %v507 = vunpack.c.l.b16 %v285
        %v508 = vunpack.c.l.b16 %v286
        %v509 = vunpack.c.l.b16 %v287
        %v510 = vunpack.c.l.b16 %v288
        %v511 = vunpack.c.l.b16 %v289
        %v512 = vunpack.c.l.b16 %v290
        %v513 = vunpack.c.l.b16 %v291
        %v514 = vunpack.c.l.b16 %v292
        %v515 = vunpack.c.l.b16 %v293
        %v516 = vunpack.c.l.b16 %v294
        %v517 = vunpack.c.l.b16 %v295
        %v518 = vunpack.c.l.b16 %v296
        %v519 = vunpack.c.l.b16 %v297
        %v520 = vunpack.c.l.b16 %v298
        %v521 = vunpack.c.l.b16 %v299
        %v522 = vunpack.c.l.b16 %v300
        %v523 = vunpack.c.l.b16 %v301
        %v524 = vunpack.c.l.b16 %v302
        %v525 = vunpack.c.l.b16 %v303
        %v526 = vunpack.c.l.b16 %v304
        %v527 = vunpack.c.l.b16 %v305
        %v528 = vunpack.c.l.b16 %v306
        %v529 = vunpack.c.l.b16 %v307
        %v530 = vunpack.c.l.b16 %v308
        %v531 = vunpack.c.l.b16 %v309
        %v532 = vunpack.c.l.b16 %v310
        %v533 = vunpack.c.l.b16 %v311
        %v534 = vunpack.c.l.b16 %v312
        %v535 = vunpack.c.l.b16 %v313
        %v536 = vunpack.c.l.b16 %v314
        %v537 = vunpack.c.l.b16 %v315
        %v538 = vunpack.c.l.b16 %v316
        %v539 = vunpack.c.l.b16 %v317
        %v540 = vunpack.c.l.b16 %v318
        %v541 = vunpack.c.l.b16 %v319
        %v542 = vunpack.c.l.b16 %v320
        %v543 = vunpack.c.l.b16 %v321
        %v544 = vunpack.c.l.b16 %v322
        %v545 = vunpack.c.l.b16 %v323
        %v546 = vunpack.c.l.b16 %v324
        %v547 = vunpack.c.l.b16 %v325
        %v548 = vunpack.c.l.b16 %v326
        %v549 = vunpack.c.l.b16 %v327
        %v550 = vunpack.c.l.b16 %v328
        %v551 = vunpack.c.l.b16 %v329
        %v552 = vunpack.c.l.b16 %v330
        %v553 = vunpack.c.l.b16 %v331
        %v554 = vunpack.c.l.b16 %v332
        %v555 = vunpack.c.l.b16 %v333
        %v556 = vunpack.c.l.b16 %v334
        %v557 = vunpack.c.l.b16 %v335
        %v558 = vunpack.c.l.b16 %v336
        %v559 = vunpack.c.l.b16 %v337
        %v560 = vunpack.c.l.b16 %v338
        %v561 = vunpack.c.l.b16 %v339
        %v562 = vunpack.c.l.b16 %v340
        %v563 = vunpack.c.l.b16 %v341
        %v564 = vunpack.c.l.b16 %v342
        %v565 = vunpack.c.l.b16 %v343
        %v566 = vunpack.c.l.b16 %v344
        %v567 = vunpack.c.l.b16 %v345
        %v568 = vunpack.c.l.b16 %v346
        %v569 = vunpack.c.l.b16 %v347
        %v570 = vunpack.c.l.b16 %v348
        %v571 = vunpack.c.l.b16 %v349
        %v572 = vunpack.c.l.b16 %v350
        %v573 = vunpack.c.l.b16 %v351
        %v574 = vunpack.c.l.b16 %v352
        %v575 = vunpack.c.l.b16 %v353
        %v576 = vunpack.c.l.b16 %v354
        %v577 = vunpack.c.l.b16 %v355
        %v578 = vunpack.c.l.b16 %v356
        %v579 = vunpack.c.l.b16 %v357
        %v580 = vunpack.c.l.b16 %v358
        %v581 = vpack.c.b16 %v486, %v485
        %v582 = vpack.c.b16 %v488, %v487
        %v583 = vpack.c.b16 %v490, %v489
        %v584 = vpack.c.b16 %v492, %v491
        %v585 = vpack.c.b16 %v494, %v493
        %v586 = vpack.c.b16 %v496, %v495
        %v587 = vpack.c.b16 %v498, %v497
        %v588 = vpack.c.b16 %v500, %v499
        %v589 = vpack.c.b16 %v502, %v501
        %v590 = vpack.c.b16 %v504, %v503
        %v591 = vpack.c.b16 %v506, %v505
        %v592 = vpack.c.b16 %v508, %v507
        %v593 = vpack.c.b16 %v510, %v509
        %v594 = vpack.c.b16 %v512, %v511
        %v595 = vpack.c.b16 %v514, %v513
        %v596 = vpack.c.b16 %v516, %v515
        %v597 = vpack.c.b16 %v518, %v517
        %v598 = vpack.c.b16 %v520, %v519
        %v599 = vpack.c.b16 %v522, %v521
        %v600 = vpack.c.b16 %v524, %v523
        %v601 = vpack.c.b16 %v526, %v525
        %v602 = vpack.c.b16 %v528, %v527
        %v603 = vpack.c.b16 %v530, %v529
        %v604 = vpack.c.b16 %v532, %v531
        %v605 = vpack.c.b16 %v534, %v533
        %v606 = vpack.c.b16 %v536, %v535
        %v607 = vpack.c.b16 %v538, %v537
        %v608 = vpack.c.b16 %v540, %v539
        %v609 = vpack.c.b16 %v542, %v541
        %v610 = vpack.c.b16 %v544, %v543
        %v611 = vpack.c.b16 %v546, %v545
        %v612 = vpack.c.b16 %v548, %v547
        %v613 = vpack.c.b16 %v550, %v549
        %v614 = vpack.c.b16 %v552, %v551
        %v615 = vpack.c.b16 %v554, %v553
        %v616 = vpack.c.b16 %v556, %v555
        %v617 = vpack.c.b16 %v558, %v557
        %v618 = vpack.c.b16 %v560, %v559
        %v619 = vpack.c.b16 %v562, %v561
        %v620 = vpack.c.b16 %v564, %v563
        %v621 = vpack.c.b16 %v566, %v565
        %v622 = vpack.c.b16 %v568, %v567
        %v623 = vpack.c.b16 %v570, %v569
        %v624 = vpack.c.b16 %v572, %v571
        %v625 = vpack.c.b16 %v574, %v573
        %v626 = vpack.c.b16 %v576, %v575
        %v627 = vpack.c.b16 %v578, %v577
        %v628 = vpack.c.b16 %v580, %v579
        %677 = vmatprep.subr.bf16.mxu0 0
        %678 = vmatpush1.bf16.msra.mxu0 %v588
        %679 = vmatprep.subr.bf16.mxu0 0
        %680 = vmatpush1.bf16.msra.mxu0 %v587
        %681 = vmatprep.subr.bf16.mxu0 0
        %682 = vmatpush1.bf16.msra.mxu0 %v586
        %683 = vmatprep.subr.bf16.mxu0 0
        %684 = vmatpush1.bf16.msra.mxu0 %v585
        %685 = vmatprep.subr.bf16.mxu0 0
        %686 = vmatpush1.bf16.msra.mxu0 %v584
        %687 = vmatprep.subr.bf16.mxu0 0
        %688 = vmatpush1.bf16.msra.mxu0 %v583
        %689 = vmatprep.subr.bf16.mxu0 0
        %690 = vmatpush1.bf16.msra.mxu0 %v582
        %691 = vmatprep.subr.bf16.mxu0 0
        %692 = vmatpush1.bf16.msra.mxu0 %v581
        %693 = vmatprep.subr.bf16.mxu0 0
        %694 = vmatpush2.bf16.msra.mxu0 %v596
        %695 = vmatprep.subr.bf16.mxu0 0
        %696 = vmatpush2.bf16.msra.mxu0 %v595
        %697 = vmatprep.subr.bf16.mxu0 0
        %698 = vmatpush2.bf16.msra.mxu0 %v594
        %699 = vmatprep.subr.bf16.mxu0 0
        %700 = vmatpush2.bf16.msra.mxu0 %v593
        %701 = vmatprep.subr.bf16.mxu0 0
        %702 = vmatpush2.bf16.msra.mxu0 %v592
        %703 = vmatprep.subr.bf16.mxu0 0
        %704 = vmatpush2.bf16.msra.mxu0 %v591
        %705 = vmatprep.subr.bf16.mxu0 0
        %706 = vmatpush2.bf16.msra.mxu0 %v590
        %707 = vmatprep.subr.bf16.mxu0 0
        %708 = vmatpush2.bf16.msra.mxu0 %v589
        %709 = vmatprep.mubr.bf16.mxu0 %v378
        %710 = vmatmul.mubr.bf16.gmra.mxu0 %v377
        %v711 = vpop.f32.mrf.mxu0
        %v712 = vadd.f32 0.0, %v711
        %v713 = vpop.f32.mrf.mxu0
        %v714 = vpop.f32.mrf.mxu0
        %v715 = vadd.f32 0.0, %v714
        %v716 = vpop.f32.mrf.mxu0
        %717 = vdwg.mxu0
        %718 = vmatprep.subr.bf16.mxu0 0
        %719 = vmatpush1.bf16.msra.mxu0 %v604
        %720 = vmatprep.subr.bf16.mxu0 0
        %721 = vmatpush1.bf16.msra.mxu0 %v603
        %722 = vmatprep.subr.bf16.mxu0 0
        %723 = vmatpush1.bf16.msra.mxu0 %v602
        %724 = vmatprep.subr.bf16.mxu0 0
        %725 = vmatpush1.bf16.msra.mxu0 %v601
        %726 = vmatprep.subr.bf16.mxu0 0
        %727 = vmatpush1.bf16.msra.mxu0 %v600
        %728 = vmatprep.subr.bf16.mxu0 0
        %729 = vmatpush1.bf16.msra.mxu0 %v599
        %730 = vmatprep.subr.bf16.mxu0 0
        %731 = vmatpush1.bf16.msra.mxu0 %v598
        %732 = vmatprep.subr.bf16.mxu0 0
        %733 = vmatpush1.bf16.msra.mxu0 %v597
        %734 = vmatprep.subr.bf16.mxu0 0
        %735 = vmatpush2.bf16.msra.mxu0 %v612
        %736 = vmatprep.subr.bf16.mxu0 0
        %737 = vmatpush2.bf16.msra.mxu0 %v611
        %738 = vmatprep.subr.bf16.mxu0 0
        %739 = vmatpush2.bf16.msra.mxu0 %v610
        %740 = vmatprep.subr.bf16.mxu0 0
        %741 = vmatpush2.bf16.msra.mxu0 %v609
        %742 = vmatprep.subr.bf16.mxu0 0
        %743 = vmatpush2.bf16.msra.mxu0 %v608
        %744 = vmatprep.subr.bf16.mxu0 0
        %745 = vmatpush2.bf16.msra.mxu0 %v607
        %746 = vmatprep.subr.bf16.mxu0 0
        %747 = vmatpush2.bf16.msra.mxu0 %v606
        %748 = vmatprep.subr.bf16.mxu0 0
        %749 = vmatpush2.bf16.msra.mxu0 %v605
        %750 = vmatprep.mubr.bf16.mxu0 %v380
        %751 = vmatmul.mubr.bf16.gmra.mxu0 %v379
        %v752 = vpop.f32.mrf.mxu0
        %v753 = vadd.f32 %v712, %v752
        %v754 = vpop.f32.mrf.mxu0
        %v755 = vpop.f32.mrf.mxu0
        %v756 = vadd.f32 %v715, %v755
        %v757 = vpop.f32.mrf.mxu0
        %758 = vdwg.mxu0
        %759 = vmatprep.subr.bf16.mxu0 0
        %760 = vmatpush1.bf16.msra.mxu0 %v620
        %761 = vmatprep.subr.bf16.mxu0 0
        %762 = vmatpush1.bf16.msra.mxu0 %v619
        %763 = vmatprep.subr.bf16.mxu0 0
        %764 = vmatpush1.bf16.msra.mxu0 %v618
        %765 = vmatprep.subr.bf16.mxu0 0
        %766 = vmatpush1.bf16.msra.mxu0 %v617
        %767 = vmatprep.subr.bf16.mxu0 0
        %768 = vmatpush1.bf16.msra.mxu0 %v616
        %769 = vmatprep.subr.bf16.mxu0 0
        %770 = vmatpush1.bf16.msra.mxu0 %v615
        %771 = vmatprep.subr.bf16.mxu0 0
        %772 = vmatpush1.bf16.msra.mxu0 %v614
        %773 = vmatprep.subr.bf16.mxu0 0
        %774 = vmatpush1.bf16.msra.mxu0 %v613
        %775 = vmatprep.subr.bf16.mxu0 0
        %776 = vmatpush2.bf16.msra.mxu0 %v628
        %777 = vmatprep.subr.bf16.mxu0 0
        %778 = vmatpush2.bf16.msra.mxu0 %v627
        %779 = vmatprep.subr.bf16.mxu0 0
        %780 = vmatpush2.bf16.msra.mxu0 %v626
        %781 = vmatprep.subr.bf16.mxu0 0
        %782 = vmatpush2.bf16.msra.mxu0 %v625
        %783 = vmatprep.subr.bf16.mxu0 0
        %784 = vmatpush2.bf16.msra.mxu0 %v624
        %785 = vmatprep.subr.bf16.mxu0 0
        %786 = vmatpush2.bf16.msra.mxu0 %v623
        %787 = vmatprep.subr.bf16.mxu0 0
        %788 = vmatpush2.bf16.msra.mxu0 %v622
        %789 = vmatprep.subr.bf16.mxu0 0
        %790 = vmatpush2.bf16.msra.mxu0 %v621
        %791 = vmatprep.mubr.bf16.mxu0 %v382
        %792 = vmatmul.mubr.bf16.gmra.mxu0 %v381
        %v793 = vpop.f32.mrf.mxu0
        %v794 = vadd.f32 %v753, %v793
        %v795 = vpop.f32.mrf.mxu0
        %v796 = vpop.f32.mrf.mxu0
        %v797 = vadd.f32 %v756, %v796
        %v798 = vpop.f32.mrf.mxu0
        %799 = vdwg.mxu0
        %v800 = vld [vmem:[%s2] sm:$0x1]
        %v802 = vlaneseq
        %v803 = vshrl.u32 %v802, 7
        %v804 = vsub.s32 0, %v803
        %v805 = vrot.slane %v800, %v804
        %v807 = vmul.f32 %v794, %v805
        %v808 = vmul.f32 %v797, %v805
        %v809 = vld [vmem:[%s3] sm:$0x1]
        %v811 = vlaneseq
        %v812 = vshrl.u32 %v811, 7
        %v813 = vsub.s32 0, %v812
        %v814 = vrot.slane %v809, %v813
        %v816 = vadd.f32 %v807, %v814
        %v817 = vadd.f32 %v808, %v814
        %v818 = vmax.f32 %v816, 0.0
        %v819 = vmax.f32 %v817, 0.0
        %v820 = vpack.c.bf16 %v819, %v818
        %v821 = vld [vmem:[%s4] sm:$0xf]
        %v822 = vld [vmem:[%s4 + $0x4] sm:$0xf]
        %v823 = vld [vmem:[%s4 + $0x8] sm:$0xf]
        %v824 = vld [vmem:[%s4 + $0xc] sm:$0xf]
        %v825 = vld [vmem:[%s4 + $0x10] sm:$0xf]
        %v826 = vld [vmem:[%s4 + $0x14] sm:$0xf]
        %v827 = vld [vmem:[%s4 + $0x18] sm:$0xf]
        %v828 = vld [vmem:[%s4 + $0x1c] sm:$0xf]
        %v829 = vld [vmem:[%s5] sm:$0x1]
        %v831 = vlaneseq
        %v832 = vshrl.u32 %v831, 7
        %v833 = vsub.s32 0, %v832
        %v834 = vrot.slane %v829, %v833
        %v844 = vunpack.c.l.b16 %v821
        %v845 = vunpack.c.l.b16 %v822
        %v846 = vunpack.c.l.b16 %v823
        %v847 = vunpack.c.l.b16 %v824
        %v848 = vunpack.c.l.b16 %v825
        %v849 = vunpack.c.l.b16 %v826
        %v850 = vunpack.c.l.b16 %v827
        %v851 = vunpack.c.l.b16 %v828
        %v852 = vpack.c.b16 %v845, %v844
        %v853 = vpack.c.b16 %v847, %v846
        %v854 = vpack.c.b16 %v849, %v848
        %v855 = vpack.c.b16 %v851, %v850
        %vm860 = vcmask 523264
        %v862 = vsel %vm860, %v820, 0
        %864 = vmatprep.subr.bf16.mxu0 0
        %865 = vmatpush1.bf16.msra.mxu0 0
        %866 = vmatprep.subr.bf16.mxu0 0
        %867 = vmatpush1.bf16.msra.mxu0 0
        %868 = vmatprep.subr.bf16.mxu0 0
        %869 = vmatpush1.bf16.msra.mxu0 0
        %870 = vmatprep.subr.bf16.mxu0 0
        %871 = vmatpush1.bf16.msra.mxu0 0
        %872 = vmatprep.subr.bf16.mxu0 0
        %873 = vmatpush1.bf16.msra.mxu0 %v855
        %874 = vmatprep.subr.bf16.mxu0 0
        %875 = vmatpush1.bf16.msra.mxu0 %v854
        %876 = vmatprep.subr.bf16.mxu0 0
        %877 = vmatpush1.bf16.msra.mxu0 %v853
        %878 = vmatprep.subr.bf16.mxu0 0
        %879 = vmatpush1.bf16.msra.mxu0 %v852
        %880 = vmatprep.subr.bf16.mxu0 0
        %881 = vmatpush2.bf16.msra.mxu0 0
        %882 = vmatprep.subr.bf16.mxu0 0
        %883 = vmatpush2.bf16.msra.mxu0 0
        %884 = vmatprep.subr.bf16.mxu0 0
        %885 = vmatpush2.bf16.msra.mxu0 0
        %886 = vmatprep.subr.bf16.mxu0 0
        %887 = vmatpush2.bf16.msra.mxu0 0
        %888 = vmatprep.subr.bf16.mxu0 0
        %889 = vmatpush2.bf16.msra.mxu0 0
        %890 = vmatprep.subr.bf16.mxu0 0
        %891 = vmatpush2.bf16.msra.mxu0 0
        %892 = vmatprep.subr.bf16.mxu0 0
        %893 = vmatpush2.bf16.msra.mxu0 0
        %894 = vmatprep.subr.bf16.mxu0 0
        %895 = vmatpush2.bf16.msra.mxu0 0
        %896 = vmatprep.mubr.bf16.mxu0 0
        %897 = vmatmul.mubr.bf16.gmra.mxu0 %v862
        %v898 = vpop.f32.mrf.mxu0
        %v899 = vadd.f32 %v834, %v898
        %v900 = vpop.f32.mrf.mxu0
        %v901 = vpop.f32.mrf.mxu0
        %v902 = vadd.f32 %v834, %v901
        %v903 = vpop.f32.mrf.mxu0
        %904 = vdwg.mxu0
        %905 = vst [vmem:[%s247] sm:$0xff] %v899
        %906 = vst [vmem:[%s247 + $0x8] sm:$0xff] %v902
        %s907 = sand.u32 %s159, 1
        %s908 = scalar_lea.sflag [#allocation3], %s907
        %s909 = sand.u32 %s159, 1
        %s910 = smul.addr %s909, 16
        %s911 = scalar_lea.vmem [#allocation2], %s910
        // Predicated region
        $region45: #{tpu_custom_call.1} parent=43 // pred_check
          %p912 = pneg %p169
        $region46: #{tpu_custom_call.1} parent=43 // pred_check_branch
          %914 = sbr.rel (%p912) target = $region48
        $region47: #{tpu_custom_call.1} parent=43 // pred_region
          %s915 = smul.u32 2, %s20
          %s917 = ssub.s32 256, 256
          %918 = vsyncadd %s908, %s917
          %s919 = smul.addr %s915, 128
          %s920 = scalar_lea.hbm %s6, %s919
          %s921 = sshll.u32 %s911, 4
          %s922 = int_to_ptr.vmem [resolvable:$true] %s921
          %927 = dma.vmem_to_hbm [thread:$0]  %s922, 256, %s920, %s908, 128, 128, 8
        $region48: #{tpu_custom_call.1} parent=43 // pred_fallthru
          _
      $region44: #{tpu_custom_call.1} parent=5 // pred_fallthru
        _
      %p928 = scmp.le.s32.totalorder 2, %s15
      // Predicated region
      $region49: #{tpu_custom_call.1} parent=5 // pred_check
        %p929 = pneg %p928
      $region50: #{tpu_custom_call.1} parent=5 // pred_check_branch
        %931 = sbr.rel (%p929) target = $region52
      $region51: #{tpu_custom_call.1} parent=5 // pred_region
        %s932 = ssub.s32 %s15, 2
        // Predicated region
        $region53: #{tpu_custom_call.1} parent=51 // pred_check
          %p933 = pneg %p175
        $region54: #{tpu_custom_call.1} parent=51 // pred_check_branch
          %935 = sbr.rel (%p933) target = $region56
        $region55: #{tpu_custom_call.1} parent=51 // pred_region
          %s936 = sand.u32 %s160, 1
          %s937 = scalar_lea.sflag [#allocation3], %s936
          %s938 = sand.u32 %s160, 1
          %s939 = smul.addr %s938, 16
          %s940 = scalar_lea.vmem [#allocation2], %s939
          %941 = dma.done %s937, 256
        $region56: #{tpu_custom_call.1} parent=51 // pred_fallthru
          _
      $region52: #{tpu_custom_call.1} parent=5 // pred_fallthru
        _
    $region6: #{tpu_custom_call.1} parent=1 // loop_footer
      %s19 = sadd.s32 1, %s15
    $region7: #{tpu_custom_call.1} parent=1 // loop_footer_branch
      %14 = sbr.rel target = $region3
    $region8: #{tpu_custom_call.1} parent=1 // loop_exit
      _
    %942 = vsyncpa [#allocation3], 1
    %s943 = scalar_lea.sflag [#allocation3], 1
    %944 = vsyncpa %s943, 1

</llo_original>
